<compile_context>
chip_gen: v7x
topology: tpu7x:2x2x1
jax: 0.10.0
libtpu: 0.0.40
codegen_flags: <defaults>
</compile_context>

<pallas_src>
import functools

import jax
import jax.numpy as jnp
from jax.experimental import pallas as pl
from jax.experimental.pallas import tpu as pltpu


def _round_up(x, m):
    return (x + m - 1) // m * m


def chebynet_kernel(x_ref, l_ref, w_ref, o_ref):
    # x_ref: (BB, N, Fin)  f32      l_ref: (N, N)        bf16
    # w_ref: (Fin, K*Fp)   bf16     o_ref: (BB, N, Fp)   f32, Fp % 128 == 0
    bb = x_ref.shape[0]
    fp = o_ref.shape[-1]
    k_taps = w_ref.shape[-1] // fp                       # static

    lap = l_ref[...]                                     # bf16, resident all taps
    w = w_ref[...]                                       # bf16 (Fin, K*Fp)

    for b in range(bb):                                  # small & static -> unrolled
        xb = x_ref[b].astype(jnp.bfloat16)               # (N, Fin)
        # All K tap-projections fused into one MXU call; output lanes K*Fp dense.
        y = jnp.dot(xb, w, preferred_element_type=jnp.float32)        # (N, K*Fp) f32
        # Horner over the monomial L^k taps. Carry stays f32; MXU operands bf16.
        # Lane slices below are 128-aligned (Fp is a multiple of 128).
        r = y[:, (k_taps - 1) * fp:]
        for k in range(k_taps - 2, -1, -1):
            r = y[:, k * fp:(k + 1) * fp] + jnp.dot(
                lap, r.astype(jnp.bfloat16), preferred_element_type=jnp.float32)
        # ReLU epilogue in f32, lane-dense (unmasked) store.
        o_ref[b] = jnp.maximum(r, 0.0).astype(o_ref.dtype)


@functools.partial(jax.jit, static_argnames=("num_batch_blocks",))
def chebynet_forward(x, L, W, *, num_batch_blocks=1):
    """x: (B, N, Fin), L: (N, N), W: (K, Fin, Fout) -> (B, N, Fout)."""
    B, N, Fin = x.shape
    K, _, Fout = W.shape

    nb = num_batch_blocks                # 1 on v5e/v6e (single TC); 2 on v7x if each
    assert B % nb == 0                   # half still has enough work & fits 64 MiB VMEM
    BB = B // nb

    Fp = _round_up(Fout, 128)            # lane-dense output / MXU columns

    # ---- one-time weight plumbing (depends only on W; cache across steps) ----
    # (K, Fin, Fout) -> (Fin, K*Fp): per-tap zero lane padding, bf16 halves DMA.
    w_pad = jnp.pad(W, ((0, 0), (0, 0), (0, Fp - Fout)))
    w_all = jnp.transpose(w_pad, (1, 0, 2)).reshape(Fin, K * Fp).astype(jnp.bfloat16)
    l_bf16 = L.astype(jnp.bfloat16)

    out = pl.pallas_call(
        chebynet_kernel,
        out_shape=jax.ShapeDtypeStruct((B, N, Fp), x.dtype),
        grid_spec=pltpu.PrefetchScalarGridSpec(
            num_scalar_prefetch=0,
            grid=(nb,),                                   # batch *blocks*
            in_specs=[
                pl.BlockSpec((BB, N, Fin), lambda g: (g, 0, 0),
                             memory_space=pltpu.MemorySpace.VMEM),
                pl.BlockSpec((N, N), lambda g: (0, 0),
                             memory_space=pltpu.MemorySpace.VMEM),
                pl.BlockSpec((Fin, K * Fp), lambda g: (0, 0),
                             memory_space=pltpu.MemorySpace.VMEM),
            ],
            out_specs=pl.BlockSpec((BB, N, Fp), lambda g: (g, 0, 0),
                                   memory_space=pltpu.MemorySpace.VMEM),
        ),
        compiler_params=pltpu.CompilerParams(
            dimension_semantics=("parallel",)),           # shards blocks on v7x; no-op 1-TC
    )(x, l_bf16, w_all)

    # Drop the lane padding (pure plumbing; skip if the consumer stays padded).
    return out[..., :Fout]


def chebynet_ref(x, L, W):
    """Pure-JAX f32 reference mirroring the PyTorch forward (monomial L^k basis)."""
    K = W.shape[0]
    N = L.shape[0]
    adj = jnp.eye(N, dtype=jnp.float32)
    result = None
    for k in range(K):
        if k == 1:
            adj = L
        elif k >= 2:
            adj = adj @ L
        out_k = jnp.einsum("nm,bmf->bnf", adj, x) @ W[k]
        result = out_k if result is None else result + out_k
    return jax.nn.relu(result)


if __name__ == "__main__":
    # Small shapes consistent with Chebynet(xdim, K, num_out):
    #   xdim = (B, N, Fin) = (2, 16, 16), K = 3, num_out = Fout = 32
    B, N, Fin, Fout, K = 2, 16, 16, 32, 3

    key = jax.random.PRNGKey(0)
    kx, kl, kw = jax.random.split(key, 3)

    x = jax.random.normal(kx, (B, N, Fin), dtype=jnp.float32)
    # symmetric "Laplacian-like" matrix
    A = jax.random.normal(kl, (N, N), dtype=jnp.float32)
    L = 0.5 * (A + A.T) / N

    # K GraphConvolution weights, xavier_normal_-style init (deterministic)
    std = (2.0 / (Fin + Fout)) ** 0.5
    W = std * jax.random.normal(kw, (K, Fin, Fout), dtype=jnp.float32)

    out = chebynet_forward(x, L, W)
    out = jax.block_until_ready(out)

    ref = chebynet_ref(x, L, W)
    assert out.shape == (B, N, Fout)
    # Tolerance loosened vs the pure-f32 version because the kernel feeds bf16
    # operands to the MXU (f32 accumulation), per the performance review.
    assert jnp.allclose(out, ref, atol=3e-2, rtol=3e-2), "mismatch vs reference"

    print("KERNEL_OK")
</pallas_src>

<mosaic_0001>
module attributes {stable_mosaic.version = 11 : i64} {
  func.func @chebynet_kernel(%arg0: i32, %arg1: memref<2x16x16xf32, #tpu.memory_space<vmem>>, %arg2: memref<16x16xbf16, #tpu.memory_space<vmem>>, %arg3: memref<16x384xbf16, #tpu.memory_space<vmem>>, %arg4: memref<2x16x128xf32, #tpu.memory_space<vmem>>) attributes {dimension_semantics = [#tpu.dimension_semantics<parallel>], iteration_bounds = array<i64: 1>, scalar_prefetch = 0 : i64, scratch_operands = 0 : i64, tpu.core_type = #tpu.core_type<tc>, window_params = [{transform_indices = @transform_0, window_bounds = array<i64: 2, 16, 16>}, {pipeline_mode = #tpu.pipeline_mode<synchronous>, transform_indices = @transform_1, window_bounds = array<i64: 16, 16>}, {pipeline_mode = #tpu.pipeline_mode<synchronous>, transform_indices = @transform_2, window_bounds = array<i64: 16, 384>}, {transform_indices = @transform_3, window_bounds = array<i64: 2, 16, 128>}]} {
    %c0 = arith.constant 0 : index
    %c0_0 = arith.constant 0 : index
    %0 = vector.load %arg2[%c0, %c0_0] : memref<16x16xbf16, #tpu.memory_space<vmem>>, vector<16x16xbf16>
    %c0_1 = arith.constant 0 : index
    %c0_2 = arith.constant 0 : index
    %1 = vector.load %arg3[%c0_1, %c0_2] : memref<16x384xbf16, #tpu.memory_space<vmem>>, vector<16x384xbf16>
    %c0_3 = arith.constant 0 : index
    %c0_4 = arith.constant 0 : index
    %c0_5 = arith.constant 0 : index
    %2 = vector.load %arg1[%c0_3, %c0_4, %c0_5] : memref<2x16x16xf32, #tpu.memory_space<vmem>>, vector<1x16x16xf32>
    %3 = vector.shape_cast %2 : vector<1x16x16xf32> to vector<16x16xf32>
    %4 = arith.truncf %3 : vector<16x16xf32> to vector<16x16xbf16>
    %cst = arith.constant dense<0.000000e+00> : vector<16x384xf32>
    %5 = tpu.matmul %4, %1, %cst {dimension_numbers = #tpu.dot_dimension_numbers<[1], [0], [0], [1], [0, 0, 1, 1], [], []>} : vector<16x16xbf16>, vector<16x384xbf16>, vector<16x384xf32> -> vector<16x384xf32>
    %6 = vector.extract_strided_slice %5 {offsets = [0, 256], sizes = [16, 128], strides = [1, 1]} : vector<16x384xf32> to vector<16x128xf32>
    %7 = vector.extract_strided_slice %5 {offsets = [0, 128], sizes = [16, 128], strides = [1, 1]} : vector<16x384xf32> to vector<16x128xf32>
    %8 = arith.truncf %6 : vector<16x128xf32> to vector<16x128xbf16>
    %cst_6 = arith.constant dense<0.000000e+00> : vector<16x128xf32>
    %9 = tpu.matmul %0, %8, %cst_6 {dimension_numbers = #tpu.dot_dimension_numbers<[1], [0], [0], [1], [0, 0, 1, 1], [], []>} : vector<16x16xbf16>, vector<16x128xbf16>, vector<16x128xf32> -> vector<16x128xf32>
    %10 = arith.addf %7, %9 : vector<16x128xf32>
    %11 = vector.extract_strided_slice %5 {offsets = [0, 0], sizes = [16, 128], strides = [1, 1]} : vector<16x384xf32> to vector<16x128xf32>
    %12 = arith.truncf %10 : vector<16x128xf32> to vector<16x128xbf16>
    %cst_7 = arith.constant dense<0.000000e+00> : vector<16x128xf32>
    %13 = tpu.matmul %0, %12, %cst_7 {dimension_numbers = #tpu.dot_dimension_numbers<[1], [0], [0], [1], [0, 0, 1, 1], [], []>} : vector<16x16xbf16>, vector<16x128xbf16>, vector<16x128xf32> -> vector<16x128xf32>
    %14 = arith.addf %11, %13 : vector<16x128xf32>
    %cst_8 = arith.constant 0.000000e+00 : f32
    %15 = vector.broadcast %cst_8 : f32 to vector<16x128xf32>
    %16 = arith.maximumf %14, %15 : vector<16x128xf32>
    %c0_9 = arith.constant 0 : index
    %c0_10 = arith.constant 0 : index
    %c0_11 = arith.constant 0 : index
    %17 = vector.load %arg4[%c0_9, %c0_10, %c0_11] : memref<2x16x128xf32, #tpu.memory_space<vmem>>, vector<1x16x128xf32>
    %18 = vector.shape_cast %17 : vector<1x16x128xf32> to vector<16x128xf32>
    %19 = vector.shape_cast %16 : vector<16x128xf32> to vector<1x16x128xf32>
    tpu.vector_store %arg4[%c0_9, %c0_10, %c0_11], %19 {strides = array<i32>} : memref<2x16x128xf32, #tpu.memory_space<vmem>>, vector<1x16x128xf32>,
    %c1 = arith.constant 1 : index
    %c0_12 = arith.constant 0 : index
    %c0_13 = arith.constant 0 : index
    %20 = vector.load %arg1[%c1, %c0_12, %c0_13] : memref<2x16x16xf32, #tpu.memory_space<vmem>>, vector<1x16x16xf32>
    %21 = vector.shape_cast %20 : vector<1x16x16xf32> to vector<16x16xf32>
    %22 = arith.truncf %21 : vector<16x16xf32> to vector<16x16xbf16>
    %cst_14 = arith.constant dense<0.000000e+00> : vector<16x384xf32>
    %23 = tpu.matmul %22, %1, %cst_14 {dimension_numbers = #tpu.dot_dimension_numbers<[1], [0], [0], [1], [0, 0, 1, 1], [], []>} : vector<16x16xbf16>, vector<16x384xbf16>, vector<16x384xf32> -> vector<16x384xf32>
    %24 = vector.extract_strided_slice %23 {offsets = [0, 256], sizes = [16, 128], strides = [1, 1]} : vector<16x384xf32> to vector<16x128xf32>
    %25 = vector.extract_strided_slice %23 {offsets = [0, 128], sizes = [16, 128], strides = [1, 1]} : vector<16x384xf32> to vector<16x128xf32>
    %26 = arith.truncf %24 : vector<16x128xf32> to vector<16x128xbf16>
    %cst_15 = arith.constant dense<0.000000e+00> : vector<16x128xf32>
    %27 = tpu.matmul %0, %26, %cst_15 {dimension_numbers = #tpu.dot_dimension_numbers<[1], [0], [0], [1], [0, 0, 1, 1], [], []>} : vector<16x16xbf16>, vector<16x128xbf16>, vector<16x128xf32> -> vector<16x128xf32>
    %28 = arith.addf %25, %27 : vector<16x128xf32>
    %29 = vector.extract_strided_slice %23 {offsets = [0, 0], sizes = [16, 128], strides = [1, 1]} : vector<16x384xf32> to vector<16x128xf32>
    %30 = arith.truncf %28 : vector<16x128xf32> to vector<16x128xbf16>
    %cst_16 = arith.constant dense<0.000000e+00> : vector<16x128xf32>
    %31 = tpu.matmul %0, %30, %cst_16 {dimension_numbers = #tpu.dot_dimension_numbers<[1], [0], [0], [1], [0, 0, 1, 1], [], []>} : vector<16x16xbf16>, vector<16x128xbf16>, vector<16x128xf32> -> vector<16x128xf32>
    %32 = arith.addf %29, %31 : vector<16x128xf32>
    %cst_17 = arith.constant 0.000000e+00 : f32
    %33 = vector.broadcast %cst_17 : f32 to vector<16x128xf32>
    %34 = arith.maximumf %32, %33 : vector<16x128xf32>
    %c1_18 = arith.constant 1 : index
    %c0_19 = arith.constant 0 : index
    %c0_20 = arith.constant 0 : index
    %35 = vector.load %arg4[%c1_18, %c0_19, %c0_20] : memref<2x16x128xf32, #tpu.memory_space<vmem>>, vector<1x16x128xf32>
    %36 = vector.shape_cast %35 : vector<1x16x128xf32> to vector<16x128xf32>
    %37 = vector.shape_cast %34 : vector<16x128xf32> to vector<1x16x128xf32>
    tpu.vector_store %arg4[%c1_18, %c0_19, %c0_20], %37 {strides = array<i32>} : memref<2x16x128xf32, #tpu.memory_space<vmem>>, vector<1x16x128xf32>,
    return
  }
  func.func @transform_0(%arg0: i32) -> (i32, i32, i32) {
    %c0_i32 = arith.constant 0 : i32
    %c0_i32_0 = arith.constant 0 : i32
    %c0_i32_1 = arith.constant 0 : i32
    return %arg0, %c0_i32, %c0_i32_0 : i32, i32, i32
  }
  func.func @transform_1(%arg0: i32) -> (i32, i32) {
    %c0_i32 = arith.constant 0 : i32
    %c0_i32_0 = arith.constant 0 : i32
    %c0_i32_1 = arith.constant 0 : i32
    return %c0_i32, %c0_i32_0 : i32, i32
  }
  func.func @transform_2(%arg0: i32) -> (i32, i32) {
    %c0_i32 = arith.constant 0 : i32
    %c0_i32_0 = arith.constant 0 : i32
    %c0_i32_1 = arith.constant 0 : i32
    return %c0_i32, %c0_i32_0 : i32, i32
  }
  func.func @transform_3(%arg0: i32) -> (i32, i32, i32) {
    %c0_i32 = arith.constant 0 : i32
    %c0_i32_0 = arith.constant 0 : i32
    %c0_i32_1 = arith.constant 0 : i32
    return %arg0, %c0_i32, %c0_i32_0 : i32, i32, i32
  }
}

</mosaic_0001>

<llo_original>
// kernel: chebynet_forward.1
$region0: #{chebynet_forward.1}
  #allocation0 [shape = 'u32[]', space=smem, size = 0x4, offset = 0x4, fixed_abs, tag = 'smem constant byte address 0x4 - core index']
  #allocation1 [shape = 'u32[144,128]{1,0:T(1,128)}', space=vmem, size = 0x12000, scoped, tag = 'internal scratch']
  %s0 = inlined_call_operand.vmem [shape: f32[2,16,16], index: 0, kind: input, shape index: {}]
  %s1 = inlined_call_operand.vmem [shape: bf16[16,16], index: 1, kind: input, shape index: {}]
  %s2 = inlined_call_operand.vmem [shape: bf16[16,384], index: 2, kind: input, shape index: {}]
  %s3 = inlined_call_operand.hbm [shape: f32[2,16,128], index: 3, kind: output, shape index: {}]
  %s4 = sld [smem:[#allocation0]]
  $region22: #{chebynet_forward.1} parent=0
    _
  %s6 = ssub.s32 1, %s4
  %s7 = scalar_select 0, %s6, %s4
  $region1: #{chebynet_forward.1} parent=0
    #allocation2 [shape = 'u8[16384]{0}', space=vmem, size = 0x4000, scoped, tag = 'output window, operand 0, single buffered']
    #allocation3 [shape = 's32[1]{0}', space=sflag, size = 0x4, scoped, tag = 'scoped memory for chebynet_forward.1']
    %8 = vsyncpa [#allocation3], 0
    // Predicated region
    $region2: #{chebynet_forward.1} parent=1 // pred_check
      _
    $region3: #{chebynet_forward.1} parent=1 // pred_check_branch
      %10 = sbr.rel (0) target = $region5
    $region4: #{chebynet_forward.1} parent=1 // pred_region
      _
    $region5: #{chebynet_forward.1} parent=1 // pred_fallthru
      _
    // Predicated region
    $region6: #{chebynet_forward.1} parent=1 // pred_check
      _
    $region7: #{chebynet_forward.1} parent=1 // pred_check_branch
      %12 = sbr.rel (0) target = $region9
    $region8: #{chebynet_forward.1} parent=1 // pred_region
      _
    $region9: #{chebynet_forward.1} parent=1 // pred_fallthru
      _
    // Predicated region
    $region10: #{chebynet_forward.1} parent=1 // pred_check
      _
    $region11: #{chebynet_forward.1} parent=1 // pred_check_branch
      %14 = sbr.rel (0) target = $region13
    $region12: #{chebynet_forward.1} parent=1 // pred_region
      _
    $region13: #{chebynet_forward.1} parent=1 // pred_fallthru
      _
    %v16 = vld [vmem:[%s1] sm:$0xf]
    %v17 = vld [vmem:[%s1 + $0x4] sm:$0xf]
    %v18 = vld [vmem:[%s2] sm:$0xff]
    %v19 = vld [vmem:[%s2 + $0x8] sm:$0xf]
    %v20 = vld [vmem:[%s2 + $0xc] sm:$0xff]
    %v21 = vld [vmem:[%s2 + $0x14] sm:$0xf]
    %v22 = vld [vmem:[%s0] sm:$0xff]
    %v23 = vld [vmem:[%s0 + $0x8] sm:$0xff]
    %v24 = vpack.c.bf16 %v23, %v22
    %v29 = vunpack.c.l.b16 %v18
    %v30 = vunpack.c.h.b16 %v18
    %v31 = vunpack.c.l.b16 %v19
    %v32 = vunpack.c.l.b16 %v20
    %v33 = vunpack.c.h.b16 %v20
    %v34 = vunpack.c.l.b16 %v21
    %v35 = vpack.c.b16 %v32, %v29
    %v36 = vpack.c.b16 %v33, %v30
    %v37 = vpack.c.b16 %v34, %v31
    %vm41 = vcmask 130048
    %v43 = vsel %vm41, %v24, 0
    %45 = vmatprep.subr.bf16.mxu0 %v36
    %46 = vmatpush1.bf16.msra.mxu0 %v35
    %47 = vmatprep.subr.bf16.mxu0 0
    %48 = vmatpush1.bf16.msra.mxu0 0
    %49 = vmatprep.subr.bf16.mxu0 0
    %50 = vmatpush1.bf16.msra.mxu0 0
    %51 = vmatprep.subr.bf16.mxu0 0
    %52 = vmatpush1.bf16.msra.mxu0 0
    %53 = vmatprep.subr.bf16.mxu0 0
    %54 = vmatpush1.bf16.msra.mxu0 0
    %55 = vmatprep.subr.bf16.mxu0 0
    %56 = vmatpush1.bf16.msra.mxu0 0
    %57 = vmatprep.subr.bf16.mxu0 0
    %58 = vmatpush1.bf16.msra.mxu0 0
    %59 = vmatprep.subr.bf16.mxu0 0
    %60 = vmatpush1.bf16.msra.mxu0 0
    %61 = vmatprep.subr.bf16.mxu0 0
    %62 = vmatpush1.bf16.msra.mxu0 0
    %63 = vmatprep.subr.bf16.mxu0 0
    %64 = vmatpush1.bf16.msra.mxu0 0
    %65 = vmatprep.subr.bf16.mxu0 0
    %66 = vmatpush1.bf16.msra.mxu0 0
    %67 = vmatprep.subr.bf16.mxu0 0
    %68 = vmatpush1.bf16.msra.mxu0 0
    %69 = vmatprep.subr.bf16.mxu0 0
    %70 = vmatpush1.bf16.msra.mxu0 0
    %71 = vmatprep.subr.bf16.mxu0 0
    %72 = vmatpush1.bf16.msra.mxu0 0
    %73 = vmatprep.subr.bf16.mxu0 0
    %74 = vmatpush1.bf16.msra.mxu0 0
    %75 = vmatprep.subr.bf16.mxu0 0
    %76 = vmatpush1.bf16.msra.mxu0 0
    %77 = vmatprep.mubr.bf16.mxu0 0
    %78 = vmatmul.mubr.bf16.gmra.mrb[0].mxu0 %v43
    %v79 = vpop.f32.mrb[0].mxu0
    %v80 = vadd.f32 0.0, %v79
    %v81 = vpop.f32.mrb[0].mxu0
    %v82 = vadd.f32 0.0, %v81
    %v83 = vpop.f32.mrb[0].mxu0
    %v84 = vadd.f32 0.0, %v83
    %v85 = vpop.f32.mrb[0].mxu0
    %v86 = vadd.f32 0.0, %v85
    %87 = vdwg.mxu0
    %88 = vmatprep.subr.bf16.mxu0 0
    %89 = vmatpush1.bf16.msra.mxu0 %v37
    %90 = vmatprep.subr.bf16.mxu0 0
    %91 = vmatpush1.bf16.msra.mxu0 0
    %92 = vmatprep.subr.bf16.mxu0 0
    %93 = vmatpush1.bf16.msra.mxu0 0
    %94 = vmatprep.subr.bf16.mxu0 0
    %95 = vmatpush1.bf16.msra.mxu0 0
    %96 = vmatprep.subr.bf16.mxu0 0
    %97 = vmatpush1.bf16.msra.mxu0 0
    %98 = vmatprep.subr.bf16.mxu0 0
    %99 = vmatpush1.bf16.msra.mxu0 0
    %100 = vmatprep.subr.bf16.mxu0 0
    %101 = vmatpush1.bf16.msra.mxu0 0
    %102 = vmatprep.subr.bf16.mxu0 0
    %103 = vmatpush1.bf16.msra.mxu0 0
    %104 = vmatprep.subr.bf16.mxu0 0
    %105 = vmatpush1.bf16.msra.mxu0 0
    %106 = vmatprep.subr.bf16.mxu0 0
    %107 = vmatpush1.bf16.msra.mxu0 0
    %108 = vmatprep.subr.bf16.mxu0 0
    %109 = vmatpush1.bf16.msra.mxu0 0
    %110 = vmatprep.subr.bf16.mxu0 0
    %111 = vmatpush1.bf16.msra.mxu0 0
    %112 = vmatprep.subr.bf16.mxu0 0
    %113 = vmatpush1.bf16.msra.mxu0 0
    %114 = vmatprep.subr.bf16.mxu0 0
    %115 = vmatpush1.bf16.msra.mxu0 0
    %116 = vmatprep.subr.bf16.mxu0 0
    %117 = vmatpush1.bf16.msra.mxu0 0
    %118 = vmatprep.subr.bf16.mxu0 0
    %119 = vmatpush1.bf16.msra.mxu0 0
    %120 = vmatprep.mubr.bf16.mxu0 0
    %121 = vmatmul.mubr.bf16.gmra.mrb[0].mxu0 %v43
    %v122 = vpop.f32.mrb[0].mxu0
    %v123 = vadd.f32 0.0, %v122
    %v124 = vpop.f32.mrb[0].mxu0
    %v125 = vpop.f32.mrb[0].mxu0
    %v126 = vadd.f32 0.0, %v125
    %v127 = vpop.f32.mrb[0].mxu0
    %128 = vdwg.mxu0
    %v129 = vpack.c.bf16 %v126, %v123
    %v132 = vunpack.c.l.b16 %v16
    %v133 = vunpack.c.l.b16 %v17
    %v134 = vpack.c.b16 %v133, %v132
    %v136 = vsel %vm41, %v134, 0
    %138 = vmatprep.subr.bf16.mxu0 0
    %139 = vmatpush1.bf16.msra.mxu0 %v129
    %140 = vmatprep.subr.bf16.mxu0 0
    %141 = vmatpush1.bf16.msra.mxu0 0
    %142 = vmatprep.subr.bf16.mxu0 0
    %143 = vmatpush1.bf16.msra.mxu0 0
    %144 = vmatprep.subr.bf16.mxu0 0
    %145 = vmatpush1.bf16.msra.mxu0 0
    %146 = vmatprep.subr.bf16.mxu0 0
    %147 = vmatpush1.bf16.msra.mxu0 0
    %148 = vmatprep.subr.bf16.mxu0 0
    %149 = vmatpush1.bf16.msra.mxu0 0
    %150 = vmatprep.subr.bf16.mxu0 0
    %151 = vmatpush1.bf16.msra.mxu0 0
    %152 = vmatprep.subr.bf16.mxu0 0
    %153 = vmatpush1.bf16.msra.mxu0 0
    %154 = vmatprep.subr.bf16.mxu0 0
    %155 = vmatpush1.bf16.msra.mxu0 0
    %156 = vmatprep.subr.bf16.mxu0 0
    %157 = vmatpush1.bf16.msra.mxu0 0
    %158 = vmatprep.subr.bf16.mxu0 0
    %159 = vmatpush1.bf16.msra.mxu0 0
    %160 = vmatprep.subr.bf16.mxu0 0
    %161 = vmatpush1.bf16.msra.mxu0 0
    %162 = vmatprep.subr.bf16.mxu0 0
    %163 = vmatpush1.bf16.msra.mxu0 0
    %164 = vmatprep.subr.bf16.mxu0 0
    %165 = vmatpush1.bf16.msra.mxu0 0
    %166 = vmatprep.subr.bf16.mxu0 0
    %167 = vmatpush1.bf16.msra.mxu0 0
    %168 = vmatprep.subr.bf16.mxu0 0
    %169 = vmatpush1.bf16.msra.mxu0 0
    %170 = vmatprep.mubr.bf16.mxu0 0
    %171 = vmatmul.mubr.bf16.gmra.mrb[0].mxu0 %v136
    %v172 = vpop.f32.mrb[0].mxu0
    %v173 = vadd.f32 0.0, %v172
    %v174 = vpop.f32.mrb[0].mxu0
    %v175 = vpop.f32.mrb[0].mxu0
    %v176 = vadd.f32 0.0, %v175
    %v177 = vpop.f32.mrb[0].mxu0
    %178 = vdwg.mxu0
    %v179 = vadd.f32 %v82, %v173
    %v180 = vadd.f32 %v86, %v176
    %v181 = vpack.c.bf16 %v180, %v179
    %182 = vmatprep.subr.bf16.mxu0 0
    %183 = vmatpush1.bf16.msra.mxu0 %v181
    %184 = vmatprep.subr.bf16.mxu0 0
    %185 = vmatpush1.bf16.msra.mxu0 0
    %186 = vmatprep.subr.bf16.mxu0 0
    %187 = vmatpush1.bf16.msra.mxu0 0
    %188 = vmatprep.subr.bf16.mxu0 0
    %189 = vmatpush1.bf16.msra.mxu0 0
    %190 = vmatprep.subr.bf16.mxu0 0
    %191 = vmatpush1.bf16.msra.mxu0 0
    %192 = vmatprep.subr.bf16.mxu0 0
    %193 = vmatpush1.bf16.msra.mxu0 0
    %194 = vmatprep.subr.bf16.mxu0 0
    %195 = vmatpush1.bf16.msra.mxu0 0
    %196 = vmatprep.subr.bf16.mxu0 0
    %197 = vmatpush1.bf16.msra.mxu0 0
    %198 = vmatprep.subr.bf16.mxu0 0
    %199 = vmatpush1.bf16.msra.mxu0 0
    %200 = vmatprep.subr.bf16.mxu0 0
    %201 = vmatpush1.bf16.msra.mxu0 0
    %202 = vmatprep.subr.bf16.mxu0 0
    %203 = vmatpush1.bf16.msra.mxu0 0
    %204 = vmatprep.subr.bf16.mxu0 0
    %205 = vmatpush1.bf16.msra.mxu0 0
    %206 = vmatprep.subr.bf16.mxu0 0
    %207 = vmatpush1.bf16.msra.mxu0 0
    %208 = vmatprep.subr.bf16.mxu0 0
    %209 = vmatpush1.bf16.msra.mxu0 0
    %210 = vmatprep.subr.bf16.mxu0 0
    %211 = vmatpush1.bf16.msra.mxu0 0
    %212 = vmatprep.subr.bf16.mxu0 0
    %213 = vmatpush1.bf16.msra.mxu0 0
    %214 = vmatprep.mubr.bf16.mxu0 0
    %215 = vmatmul.mubr.bf16.gmra.mrb[0].mxu0 %v136
    %v216 = vpop.f32.mrb[0].mxu0
    %v217 = vadd.f32 0.0, %v216
    %v218 = vpop.f32.mrb[0].mxu0
    %v219 = vpop.f32.mrb[0].mxu0
    %v220 = vadd.f32 0.0, %v219
    %v221 = vpop.f32.mrb[0].mxu0
    %222 = vdwg.mxu0
    %v223 = vadd.f32 %v80, %v217
    %v224 = vadd.f32 %v84, %v220
    %v225 = vmax.f32 %v223, 0.0
    %v226 = vmax.f32 %v224, 0.0
    %227 = vst [vmem:[#allocation2] sm:$0xff] %v225
    %228 = vst [vmem:[#allocation2 + $0x8] sm:$0xff] %v226
    %s229 = scalar_lea.vmem %s0, 16
    %v230 = vld [vmem:[%s229] sm:$0xff]
    %v231 = vld [vmem:[%s229 + $0x8] sm:$0xff]
    %v232 = vpack.c.bf16 %v231, %v230
    %v234 = vsel %vm41, %v232, 0
    %236 = vmatprep.subr.bf16.mxu0 %v36
    %237 = vmatpush1.bf16.msra.mxu0 %v35
    %238 = vmatprep.subr.bf16.mxu0 0
    %239 = vmatpush1.bf16.msra.mxu0 0
    %240 = vmatprep.subr.bf16.mxu0 0
    %241 = vmatpush1.bf16.msra.mxu0 0
    %242 = vmatprep.subr.bf16.mxu0 0
    %243 = vmatpush1.bf16.msra.mxu0 0
    %244 = vmatprep.subr.bf16.mxu0 0
    %245 = vmatpush1.bf16.msra.mxu0 0
    %246 = vmatprep.subr.bf16.mxu0 0
    %247 = vmatpush1.bf16.msra.mxu0 0
    %248 = vmatprep.subr.bf16.mxu0 0
    %249 = vmatpush1.bf16.msra.mxu0 0
    %250 = vmatprep.subr.bf16.mxu0 0
    %251 = vmatpush1.bf16.msra.mxu0 0
    %252 = vmatprep.subr.bf16.mxu0 0
    %253 = vmatpush1.bf16.msra.mxu0 0
    %254 = vmatprep.subr.bf16.mxu0 0
    %255 = vmatpush1.bf16.msra.mxu0 0
    %256 = vmatprep.subr.bf16.mxu0 0
    %257 = vmatpush1.bf16.msra.mxu0 0
    %258 = vmatprep.subr.bf16.mxu0 0
    %259 = vmatpush1.bf16.msra.mxu0 0
    %260 = vmatprep.subr.bf16.mxu0 0
    %261 = vmatpush1.bf16.msra.mxu0 0
    %262 = vmatprep.subr.bf16.mxu0 0
    %263 = vmatpush1.bf16.msra.mxu0 0
    %264 = vmatprep.subr.bf16.mxu0 0
    %265 = vmatpush1.bf16.msra.mxu0 0
    %266 = vmatprep.subr.bf16.mxu0 0
    %267 = vmatpush1.bf16.msra.mxu0 0
    %268 = vmatprep.mubr.bf16.mxu0 0
    %269 = vmatmul.mubr.bf16.gmra.mrb[0].mxu0 %v234
    %v270 = vpop.f32.mrb[0].mxu0
    %v271 = vadd.f32 0.0, %v270
    %v272 = vpop.f32.mrb[0].mxu0
    %v273 = vadd.f32 0.0, %v272
    %v274 = vpop.f32.mrb[0].mxu0
    %v275 = vadd.f32 0.0, %v274
    %v276 = vpop.f32.mrb[0].mxu0
    %v277 = vadd.f32 0.0, %v276
    %278 = vdwg.mxu0
    %279 = vmatprep.subr.bf16.mxu0 0
    %280 = vmatpush1.bf16.msra.mxu0 %v37
    %281 = vmatprep.subr.bf16.mxu0 0
    %282 = vmatpush1.bf16.msra.mxu0 0
    %283 = vmatprep.subr.bf16.mxu0 0
    %284 = vmatpush1.bf16.msra.mxu0 0
    %285 = vmatprep.subr.bf16.mxu0 0
    %286 = vmatpush1.bf16.msra.mxu0 0
    %287 = vmatprep.subr.bf16.mxu0 0
    %288 = vmatpush1.bf16.msra.mxu0 0
    %289 = vmatprep.subr.bf16.mxu0 0
    %290 = vmatpush1.bf16.msra.mxu0 0
    %291 = vmatprep.subr.bf16.mxu0 0
    %292 = vmatpush1.bf16.msra.mxu0 0
    %293 = vmatprep.subr.bf16.mxu0 0
    %294 = vmatpush1.bf16.msra.mxu0 0
    %295 = vmatprep.subr.bf16.mxu0 0
    %296 = vmatpush1.bf16.msra.mxu0 0
    %297 = vmatprep.subr.bf16.mxu0 0
    %298 = vmatpush1.bf16.msra.mxu0 0
    %299 = vmatprep.subr.bf16.mxu0 0
    %300 = vmatpush1.bf16.msra.mxu0 0
    %301 = vmatprep.subr.bf16.mxu0 0
    %302 = vmatpush1.bf16.msra.mxu0 0
    %303 = vmatprep.subr.bf16.mxu0 0
    %304 = vmatpush1.bf16.msra.mxu0 0
    %305 = vmatprep.subr.bf16.mxu0 0
    %306 = vmatpush1.bf16.msra.mxu0 0
    %307 = vmatprep.subr.bf16.mxu0 0
    %308 = vmatpush1.bf16.msra.mxu0 0
    %309 = vmatprep.subr.bf16.mxu0 0
    %310 = vmatpush1.bf16.msra.mxu0 0
    %311 = vmatprep.mubr.bf16.mxu0 0
    %312 = vmatmul.mubr.bf16.gmra.mrb[0].mxu0 %v234
    %v313 = vpop.f32.mrb[0].mxu0
    %v314 = vadd.f32 0.0, %v313
    %v315 = vpop.f32.mrb[0].mxu0
    %v316 = vpop.f32.mrb[0].mxu0
    %v317 = vadd.f32 0.0, %v316
    %v318 = vpop.f32.mrb[0].mxu0
    %319 = vdwg.mxu0
    %v320 = vpack.c.bf16 %v317, %v314
    %321 = vmatprep.subr.bf16.mxu0 0
    %322 = vmatpush1.bf16.msra.mxu0 %v320
    %323 = vmatprep.subr.bf16.mxu0 0
    %324 = vmatpush1.bf16.msra.mxu0 0
    %325 = vmatprep.subr.bf16.mxu0 0
    %326 = vmatpush1.bf16.msra.mxu0 0
    %327 = vmatprep.subr.bf16.mxu0 0
    %328 = vmatpush1.bf16.msra.mxu0 0
    %329 = vmatprep.subr.bf16.mxu0 0
    %330 = vmatpush1.bf16.msra.mxu0 0
    %331 = vmatprep.subr.bf16.mxu0 0
    %332 = vmatpush1.bf16.msra.mxu0 0
    %333 = vmatprep.subr.bf16.mxu0 0
    %334 = vmatpush1.bf16.msra.mxu0 0
    %335 = vmatprep.subr.bf16.mxu0 0
    %336 = vmatpush1.bf16.msra.mxu0 0
    %337 = vmatprep.subr.bf16.mxu0 0
    %338 = vmatpush1.bf16.msra.mxu0 0
    %339 = vmatprep.subr.bf16.mxu0 0
    %340 = vmatpush1.bf16.msra.mxu0 0
    %341 = vmatprep.subr.bf16.mxu0 0
    %342 = vmatpush1.bf16.msra.mxu0 0
    %343 = vmatprep.subr.bf16.mxu0 0
    %344 = vmatpush1.bf16.msra.mxu0 0
    %345 = vmatprep.subr.bf16.mxu0 0
    %346 = vmatpush1.bf16.msra.mxu0 0
    %347 = vmatprep.subr.bf16.mxu0 0
    %348 = vmatpush1.bf16.msra.mxu0 0
    %349 = vmatprep.subr.bf16.mxu0 0
    %350 = vmatpush1.bf16.msra.mxu0 0
    %351 = vmatprep.subr.bf16.mxu0 0
    %352 = vmatpush1.bf16.msra.mxu0 0
    %353 = vmatprep.mubr.bf16.mxu0 0
    %354 = vmatmul.mubr.bf16.gmra.mrb[0].mxu0 %v136
    %v355 = vpop.f32.mrb[0].mxu0
    %v356 = vadd.f32 0.0, %v355
    %v357 = vpop.f32.mrb[0].mxu0
    %v358 = vpop.f32.mrb[0].mxu0
    %v359 = vadd.f32 0.0, %v358
    %v360 = vpop.f32.mrb[0].mxu0
    %361 = vdwg.mxu0
    %v362 = vadd.f32 %v273, %v356
    %v363 = vadd.f32 %v277, %v359
    %v364 = vpack.c.bf16 %v363, %v362
    %365 = vmatprep.subr.bf16.mxu0 0
    %366 = vmatpush1.bf16.msra.mxu0 %v364
    %367 = vmatprep.subr.bf16.mxu0 0
    %368 = vmatpush1.bf16.msra.mxu0 0
    %369 = vmatprep.subr.bf16.mxu0 0
    %370 = vmatpush1.bf16.msra.mxu0 0
    %371 = vmatprep.subr.bf16.mxu0 0
    %372 = vmatpush1.bf16.msra.mxu0 0
    %373 = vmatprep.subr.bf16.mxu0 0
    %374 = vmatpush1.bf16.msra.mxu0 0
    %375 = vmatprep.subr.bf16.mxu0 0
    %376 = vmatpush1.bf16.msra.mxu0 0
    %377 = vmatprep.subr.bf16.mxu0 0
    %378 = vmatpush1.bf16.msra.mxu0 0
    %379 = vmatprep.subr.bf16.mxu0 0
    %380 = vmatpush1.bf16.msra.mxu0 0
    %381 = vmatprep.subr.bf16.mxu0 0
    %382 = vmatpush1.bf16.msra.mxu0 0
    %383 = vmatprep.subr.bf16.mxu0 0
    %384 = vmatpush1.bf16.msra.mxu0 0
    %385 = vmatprep.subr.bf16.mxu0 0
    %386 = vmatpush1.bf16.msra.mxu0 0
    %387 = vmatprep.subr.bf16.mxu0 0
    %388 = vmatpush1.bf16.msra.mxu0 0
    %389 = vmatprep.subr.bf16.mxu0 0
    %390 = vmatpush1.bf16.msra.mxu0 0
    %391 = vmatprep.subr.bf16.mxu0 0
    %392 = vmatpush1.bf16.msra.mxu0 0
    %393 = vmatprep.subr.bf16.mxu0 0
    %394 = vmatpush1.bf16.msra.mxu0 0
    %395 = vmatprep.subr.bf16.mxu0 0
    %396 = vmatpush1.bf16.msra.mxu0 0
    %397 = vmatprep.mubr.bf16.mxu0 0
    %398 = vmatmul.mubr.bf16.gmra.mrb[0].mxu0 %v136
    %v399 = vpop.f32.mrb[0].mxu0
    %v400 = vadd.f32 0.0, %v399
    %v401 = vpop.f32.mrb[0].mxu0
    %v402 = vpop.f32.mrb[0].mxu0
    %v403 = vadd.f32 0.0, %v402
    %v404 = vpop.f32.mrb[0].mxu0
    %405 = vdwg.mxu0
    %v406 = vadd.f32 %v271, %v400
    %v407 = vadd.f32 %v275, %v403
    %v408 = vmax.f32 %v406, 0.0
    %v409 = vmax.f32 %v407, 0.0
    %s410 = scalar_lea.vmem [#allocation2], 16
    %411 = vst [vmem:[%s410] sm:$0xff] %v408
    %412 = vst [vmem:[%s410 + $0x8] sm:$0xff] %v409
    // Predicated region
    $region14: #{chebynet_forward.1} parent=1 // pred_check
      _
    $region15: #{chebynet_forward.1} parent=1 // pred_check_branch
      %414 = sbr.rel (0) target = $region17
    $region16: #{chebynet_forward.1} parent=1 // pred_region
      %s416 = ssub.s32 512, 512
      %417 = vsyncadd [#allocation3], %s416
      %s418 = sshll.u32 [#allocation2], 4
      %s419 = int_to_ptr.vmem [resolvable:$true] %s418
      %424 = dma.vmem_to_hbm [thread:$0]  %s419, 512, %s3, [#allocation3], 128, 128, 8
    $region17: #{chebynet_forward.1} parent=1 // pred_fallthru
      _
    // Predicated region
    $region18: #{chebynet_forward.1} parent=1 // pred_check
      _
    $region19: #{chebynet_forward.1} parent=1 // pred_check_branch
      %426 = sbr.rel (0) target = $region21
    $region20: #{chebynet_forward.1} parent=1 // pred_region
      %427 = dma.done [#allocation3], 512
    $region21: #{chebynet_forward.1} parent=1 // pred_fallthru
      _
    %428 = vsyncpa [#allocation3], 1

</llo_original>
